<compile_context>
chip_gen: v5e
topology: v5e:2x2
jax: 0.10.0
libtpu: 0.0.40
codegen_flags: <defaults>
</compile_context>

<pallas_src>
import jax
import jax.numpy as jnp
from jax.experimental import pallas as pl
from jax.experimental.pallas import tpu as pltpu


def _div_tile(n, unit, cap):
    """Largest divisor of n that is a multiple of `unit` and <= cap, else n (full)."""
    if n <= cap or n % unit != 0:
        return n
    t = (min(n, cap) // unit) * unit
    while t >= unit:
        if n % t == 0:
            return t
        t -= unit
    return n


def _stats_kernel(xre_ref, xim_ref, stats_ref):
    # xre_ref / xim_ref: (1, tC, tL) blocks of the native (B, C, H*W) layout.
    # stats_ref: (tC, 4) accumulator, resident in VMEM across all (b, l) steps
    # of the current channel tile (same output block index).
    @pl.when((pl.program_id(1) == 0) & (pl.program_id(2) == 0))
    def _():
        stats_ref[...] = jnp.zeros_like(stats_ref)

    xr = xre_ref[0]                                    # (tC, tL)
    xi = xim_ref[0]
    sr = jnp.sum(xr, axis=1, keepdims=True)            # cross-lane XLU reduce
    sqr = jnp.sum(xr * xr, axis=1, keepdims=True)
    si = jnp.sum(xi, axis=1, keepdims=True)
    sqi = jnp.sum(xi * xi, axis=1, keepdims=True)
    stats_ref[...] += jnp.concatenate([sr, sqr, si, sqi], axis=1)   # (tC, 4)


def _norm_kernel(xre_ref, xim_ref, ss_ref, ore_ref, oim_ref):
    # ss_ref: (4, tC, 1) = [scale_re, shift_re, scale_im, shift_im] per channel.
    ss = ss_ref[...]
    ore_ref[...] = xre_ref[...] * ss[0:1] + ss[1:2]
    oim_ref[...] = xim_ref[...] * ss[2:3] + ss[3:4]


def complex_batchnorm_2d(x, gamma_re, beta_re, gamma_im, beta_im, *, eps=1e-5):
    """Training-mode forward of ComplexBatchNorm2D on a complex NCHW tensor."""
    assert jnp.issubdtype(x.dtype, jnp.complexfloating)
    B, C, H, W = x.shape
    L = H * W

    # Native layout; trailing-dim reshape only (free, no data movement).
    x_re = jnp.real(x).astype(jnp.float32).reshape(B, C, L)
    x_im = jnp.imag(x).astype(jnp.float32).reshape(B, C, L)

    # Tile selection: lane tiles multiple of 128 (unmasked stores), channel
    # tiles multiple of 8, ~1 MiB per x block.  If a dim can't be tiled
    # evenly it is kept full (still legal per the (8,128) rule).
    lane_cap = max(2048, ((1 << 20) // (4 * C)) // 128 * 128)
    tL = _div_tile(L, 128, lane_cap)
    tC = _div_tile(C, 8, max(8, (1 << 20) // (4 * tL)))
    nL = L // tL
    nC = C // tC
    nelem = B * C * L

    # ---- pass 1: per-channel sum & sum-of-squares (single read sweep) ----
    stats = pl.pallas_call(
        _stats_kernel,
        out_shape=jax.ShapeDtypeStruct((C, 4), jnp.float32),
        grid=(nC, B, nL),
        in_specs=[
            pl.BlockSpec((1, tC, tL), lambda c, b, l: (b, c, l)),
            pl.BlockSpec((1, tC, tL), lambda c, b, l: (b, c, l)),
        ],
        out_specs=pl.BlockSpec((tC, 4), lambda c, b, l: (c, 0)),
        compiler_params=pltpu.CompilerParams(
            dimension_semantics=("parallel", "arbitrary", "arbitrary")),
        cost_estimate=pl.CostEstimate(
            flops=6 * nelem, transcendentals=0,
            bytes_accessed=2 * nelem * 4 + C * 4 * 4),
    )(x_re, x_im)

    # ---- tiny per-channel math in plain XLA ((C,)-sized, negligible) ----
    n = float(B * L)
    sum_re, sumsq_re = stats[:, 0], stats[:, 1]
    sum_im, sumsq_im = stats[:, 2], stats[:, 3]
    mean_re = sum_re / n
    mean_im = sum_im / n
    var_re = jnp.maximum(sumsq_re / n - mean_re * mean_re, 0.0)
    var_im = jnp.maximum(sumsq_im / n - mean_im * mean_im, 0.0)
    scale_re = gamma_re.astype(jnp.float32) * jax.lax.rsqrt(var_re + eps)
    shift_re = beta_re.astype(jnp.float32) - mean_re * scale_re
    scale_im = gamma_im.astype(jnp.float32) * jax.lax.rsqrt(var_im + eps)
    shift_im = beta_im.astype(jnp.float32) - mean_im * scale_im
    ss = jnp.stack([scale_re, shift_re, scale_im, shift_im], axis=0)[:, :, None]  # (4,C,1)

    # ---- pass 2: normalize + affine (1 read + 1 write, fully parallel) ----
    out_re, out_im = pl.pallas_call(
        _norm_kernel,
        out_shape=(jax.ShapeDtypeStruct((B, C, L), jnp.float32),
                   jax.ShapeDtypeStruct((B, C, L), jnp.float32)),
        grid=(nC, B, nL),
        in_specs=[
            pl.BlockSpec((1, tC, tL), lambda c, b, l: (b, c, l)),
            pl.BlockSpec((1, tC, tL), lambda c, b, l: (b, c, l)),
            pl.BlockSpec((4, tC, 1), lambda c, b, l: (0, c, 0)),  # DMA'd only on c change
        ],
        out_specs=(
            pl.BlockSpec((1, tC, tL), lambda c, b, l: (b, c, l)),
            pl.BlockSpec((1, tC, tL), lambda c, b, l: (b, c, l)),
        ),
        compiler_params=pltpu.CompilerParams(
            dimension_semantics=("parallel", "parallel", "parallel")),
        cost_estimate=pl.CostEstimate(
            flops=4 * nelem, transcendentals=0,
            bytes_accessed=4 * nelem * 4 + 4 * C * 4),
    )(x_re, x_im, ss)

    out_re = out_re.reshape(B, C, H, W)   # trailing-dim reshape: free
    out_im = out_im.reshape(B, C, H, W)
    return jax.lax.complex(out_re, out_im)
    # TODO(synk): running_mean/running_var momentum updates (track_running_stats)
    # are training-state bookkeeping that does not affect the training-mode
    # forward output; they are not computed here.


if __name__ == "__main__":
    key = jax.random.PRNGKey(0)
    kr, ki, kg1, kb1, kg2, kb2 = jax.random.split(key, 6)
    B, C, H, W = 2, 4, 16, 16  # NCHW, matching the PyTorch conv-style layout

    x_real = jax.random.normal(kr, (B, C, H, W), dtype=jnp.float32)
    x_imag = jax.random.normal(ki, (B, C, H, W), dtype=jnp.float32)
    x = jax.lax.complex(x_real, x_imag)  # complex64

    # Affine parameters of the two BatchNorm2d branches (perturbed from the
    # torch defaults gamma=1, beta=0 so the affine path is actually exercised).
    gamma_re = 1.0 + 0.1 * jax.random.normal(kg1, (C,), dtype=jnp.float32)
    beta_re = 0.1 * jax.random.normal(kb1, (C,), dtype=jnp.float32)
    gamma_im = 1.0 + 0.1 * jax.random.normal(kg2, (C,), dtype=jnp.float32)
    beta_im = 0.1 * jax.random.normal(kb2, (C,), dtype=jnp.float32)

    out = complex_batchnorm_2d(x, gamma_re, beta_re, gamma_im, beta_im, eps=1e-5)
    out = jax.block_until_ready(out)

    # Plain-JAX reference: training-mode BatchNorm2d applied to each component.
    def bn_ref(xc, gamma, beta, eps=1e-5):
        mean = xc.mean(axis=(0, 2, 3), keepdims=True)
        var = ((xc - mean) ** 2).mean(axis=(0, 2, 3), keepdims=True)
        return (xc - mean) / jnp.sqrt(var + eps) * gamma[None, :, None, None] \
            + beta[None, :, None, None]

    ref = jax.lax.complex(
        bn_ref(x_real, gamma_re, beta_re),
        bn_ref(x_imag, gamma_im, beta_im),
    )

    assert out.shape == x.shape and out.dtype == x.dtype
    assert jnp.allclose(out, ref, atol=1e-4, rtol=1e-4), "mismatch vs reference"

    print("KERNEL_OK")
</pallas_src>

<mosaic_0001>
module attributes {stable_mosaic.version = 11 : i64} {
  func.func @_stats_kernel(%arg0: i32, %arg1: i32, %arg2: i32, %arg3: memref<1x4x256xf32, #tpu.memory_space<vmem>>, %arg4: memref<1x4x256xf32, #tpu.memory_space<vmem>>, %arg5: memref<4x4xf32, #tpu.memory_space<vmem>>) attributes {dimension_semantics = [#tpu.dimension_semantics<parallel>, #tpu.dimension_semantics<arbitrary>, #tpu.dimension_semantics<arbitrary>], iteration_bounds = array<i64: 1, 2, 1>, scalar_prefetch = 0 : i64, scratch_operands = 0 : i64, tpu.core_type = #tpu.core_type<tc>, window_params = [{transform_indices = @transform_0, window_bounds = array<i64: 1, 4, 256>}, {transform_indices = @transform_1, window_bounds = array<i64: 1, 4, 256>}, {transform_indices = @transform_2, window_bounds = array<i64: 4, 4>}]} {
    %c0_i32 = arith.constant 0 : i32
    %0 = arith.cmpi eq, %arg1, %c0_i32 : i32
    %c0_i32_0 = arith.constant 0 : i32
    %1 = arith.cmpi eq, %arg2, %c0_i32_0 : i32
    %2 = arith.andi %0, %1 : i1
    %3 = arith.extui %2 : i1 to i32
    %c0_i32_1 = arith.constant 0 : i32
    %4 = arith.cmpi ne, %3, %c0_i32_1 : i32
    scf.if %4 {
      %cst_14 = arith.constant 0.000000e+00 : f32
      %23 = vector.broadcast %cst_14 : f32 to vector<4x4xf32>
      %c0_15 = arith.constant 0 : index
      %c0_16 = arith.constant 0 : index
      %24 = vector.load %arg5[%c0_15, %c0_16] : memref<4x4xf32, #tpu.memory_space<vmem>>, vector<4x4xf32>
      tpu.vector_store %arg5[%c0_15, %c0_16], %23 {strides = array<i32>} : memref<4x4xf32, #tpu.memory_space<vmem>>, vector<4x4xf32>,
    } else {
    }
    %c0 = arith.constant 0 : index
    %c0_2 = arith.constant 0 : index
    %c0_3 = arith.constant 0 : index
    %5 = vector.load %arg3[%c0, %c0_2, %c0_3] : memref<1x4x256xf32, #tpu.memory_space<vmem>>, vector<1x4x256xf32>
    %6 = vector.shape_cast %5 : vector<1x4x256xf32> to vector<4x256xf32>
    %c0_4 = arith.constant 0 : index
    %c0_5 = arith.constant 0 : index
    %c0_6 = arith.constant 0 : index
    %7 = vector.load %arg4[%c0_4, %c0_5, %c0_6] : memref<1x4x256xf32, #tpu.memory_space<vmem>>, vector<1x4x256xf32>
    %8 = vector.shape_cast %7 : vector<1x4x256xf32> to vector<4x256xf32>
    %cst = arith.constant dense<0.000000e+00> : vector<4xf32>
    %9 = vector.multi_reduction <add>, %6, %cst [1] : vector<4x256xf32> to vector<4xf32>
    %10 = vector.shape_cast %9 : vector<4xf32> to vector<4x1xf32>
    %11 = arith.mulf %6, %6 : vector<4x256xf32>
    %cst_7 = arith.constant dense<0.000000e+00> : vector<4xf32>
    %12 = vector.multi_reduction <add>, %11, %cst_7 [1] : vector<4x256xf32> to vector<4xf32>
    %13 = vector.shape_cast %12 : vector<4xf32> to vector<4x1xf32>
    %cst_8 = arith.constant dense<0.000000e+00> : vector<4xf32>
    %14 = vector.multi_reduction <add>, %8, %cst_8 [1] : vector<4x256xf32> to vector<4xf32>
    %15 = vector.shape_cast %14 : vector<4xf32> to vector<4x1xf32>
    %16 = arith.mulf %8, %8 : vector<4x256xf32>
    %cst_9 = arith.constant dense<0.000000e+00> : vector<4xf32>
    %17 = vector.multi_reduction <add>, %16, %cst_9 [1] : vector<4x256xf32> to vector<4xf32>
    %18 = vector.shape_cast %17 : vector<4xf32> to vector<4x1xf32>
    %c0_10 = arith.constant 0 : index
    %c0_11 = arith.constant 0 : index
    %19 = vector.load %arg5[%c0_10, %c0_11] : memref<4x4xf32, #tpu.memory_space<vmem>>, vector<4x4xf32>
    %20 = tpu.concatenate %10, %13, %15, %18 in 1 : vector<4x1xf32>, vector<4x1xf32>, vector<4x1xf32>, vector<4x1xf32> -> vector<4x4xf32>
    %21 = arith.addf %19, %20 : vector<4x4xf32>
    %c0_12 = arith.constant 0 : index
    %c0_13 = arith.constant 0 : index
    %22 = vector.load %arg5[%c0_12, %c0_13] : memref<4x4xf32, #tpu.memory_space<vmem>>, vector<4x4xf32>
    tpu.vector_store %arg5[%c0_12, %c0_13], %21 {strides = array<i32>} : memref<4x4xf32, #tpu.memory_space<vmem>>, vector<4x4xf32>,
    return
  }
  func.func @transform_0(%arg0: i32, %arg1: i32, %arg2: i32) -> (i32, i32, i32) {
    %c0_i32 = arith.constant 0 : i32
    return %arg1, %arg0, %arg2 : i32, i32, i32
  }
  func.func @transform_1(%arg0: i32, %arg1: i32, %arg2: i32) -> (i32, i32, i32) {
    %c0_i32 = arith.constant 0 : i32
    return %arg1, %arg0, %arg2 : i32, i32, i32
  }
  func.func @transform_2(%arg0: i32, %arg1: i32, %arg2: i32) -> (i32, i32) {
    %c0_i32 = arith.constant 0 : i32
    %c0_i32_0 = arith.constant 0 : i32
    return %arg0, %c0_i32 : i32, i32
  }
}

</mosaic_0001>

<llo_original>
// kernel: tpu_custom_call.1
$region0: #{tpu_custom_call.1}
  #allocation0 [shape = 'u32[]', space=smem, size = 0x4, offset = 0x4, fixed_abs, tag = 'smem constant byte address 0x4 - core index']
  #allocation1 [shape = 'u32[72,128]{1,0:T(1,128)}', space=vmem, size = 0x9000, scoped, tag = 'internal scratch']
  %s0 = inlined_call_operand.hbm [shape: f32[2,4,256], index: 0, kind: input, shape index: {}]
  %s1 = inlined_call_operand.hbm [shape: f32[2,4,256], index: 1, kind: input, shape index: {}]
  %s2 = inlined_call_operand.hbm [shape: f32[4,4], index: 2, kind: output, shape index: {}]
  %s3 = sld [smem:[#allocation0]]
  $region53: #{tpu_custom_call.1} parent=0
    _
  %s5 = ssub.s32 1, %s3
  %s6 = scalar_select 0, %s5, %s3
  $region1: #{tpu_custom_call.1} parent=0
    #allocation2 [shape = 'u8[8192]{0}', space=vmem, size = 0x2000, scoped, tag = 'input window, operand 0']
    #allocation3 [shape = 's32[2]{0}', space=sflag, size = 0x8, scoped, tag = 'scoped memory for tpu_custom_call.1']
    #allocation4 [shape = 's32[2]{0}', space=sflag, size = 0x8, scoped, tag = 'scoped memory for tpu_custom_call.1']
    #allocation5 [shape = 'u8[8192]{0}', space=vmem, size = 0x2000, scoped, tag = 'input window, operand 1']
    #allocation6 [shape = 's32[2]{0}', space=sflag, size = 0x8, scoped, tag = 'scoped memory for tpu_custom_call.1']
    #allocation7 [shape = 'u8[2048]{0}', space=vmem, size = 0x800, scoped, tag = 'output window, operand 0, single buffered']
    %7 = vsyncpa [#allocation3], 0
    %s8 = scalar_lea.sflag [#allocation3], 1
    %9 = vsyncpa %s8, 0
    %10 = vsyncpa [#allocation6], 0
    %s11 = scalar_lea.sflag [#allocation6], 1
    %12 = vsyncpa %s11, 0
    %13 = vsyncpa [#allocation4], 0
    loop: start=0, step=1, limit=4
    $region2: #{tpu_custom_call.1} parent=1 // loop_pre_header
      _
    $region3: #{tpu_custom_call.1} parent=1 // loop_header
      %s15 = sphi 0, %s19
      %p16 = scmp.ge.s32.totalorder %s15, 4
      %s22 = sphi 0, %s41
      %s23 = sphi 0, %s37
      %s24 = sphi 0, %s33
      %s25 = sphi 0, %s22
      %s26 = sphi 0, %s23
      %s27 = sphi 0, %s24
      %s28 = sphi 0, %s25
      %s29 = sphi 0, %s26
      %s30 = sphi 0, %s27
      %s48 = sphi 0, %s50
      %s51 = sphi 0, %s48
      %s52 = sphi 0, %s51
      %s68 = sphi 0, %s52
      %s78 = sphi 0, %s80
      %s81 = sphi 0, %s78
      %s82 = sphi 0, %s81
      %s98 = sphi 0, %s82
      %s104 = sphi 0, %s106
      %s107 = sphi 0, %s104
      %s108 = sphi 0, %s107
      %s124 = sphi 0, %s108
    $region4: #{tpu_custom_call.1} parent=1 // loop_header_branch
      %18 = sbr.rel (%p16) target = $region8
    $region5: #{tpu_custom_call.1} parent=1 // loop_body
      %s20 = ssub.s32 %s15, 1
      %s21 = ssub.s32 %s15, 2
      %s31 = sadd.s32 1, %s24
      %p32 = scmp.ge.s32.totalorder %s31, 1
      %s33 = scalar_select %p32, 0, %s31
      %s34 = sadd.s32 1, %s23
      %s35 = scalar_select %p32, %s34, %s23
      %p36 = scmp.ge.s32.totalorder %s35, 2
      %s37 = scalar_select %p36, 0, %s35
      %s38 = sadd.s32 1, %s22
      %s39 = scalar_select %p36, %s38, %s22
      %p40 = scmp.ge.s32.totalorder %s39, 1
      %s41 = scalar_select %p40, 0, %s39
      %s42 = ssub.s32 %s23, %s37
      %s43 = ssub.s32 %s22, %s41
      %s44 = sor.u32 %s42, %s43
      %s45 = ssub.s32 %s24, %s33
      %s46 = sor.u32 %s44, %s45
      %p47 = scmp.eq.s32.totalorder %s46, 0
      %s49 = sadd.s32 %s48, 1
      %s50 = scalar_select %p47, %s48, %s49
      %p53 = pneg %p47
      %p54 = scmp.eq.s32.totalorder %s15, 1
      %p55 = por %p53, %p54
      %p56 = scmp.ne.s32.totalorder %s48, %s51
      %p57 = scmp.eq.s32.totalorder %s15, 0
      %p58 = por %p56, %p57
      %p59 = scmp.ne.s32.totalorder %s48, %s51
      %p60 = scmp.eq.s32.totalorder %s20, 1
      %p61 = por %p59, %p60
      %p62 = scmp.ne.s32.totalorder %s51, %s52
      %p63 = scmp.eq.s32.totalorder %s20, 0
      %p64 = por %p62, %p63
      %p65 = scmp.ne.s32.totalorder %s51, %s52
      %p66 = scmp.eq.s32.totalorder %s21, 1
      %p67 = por %p65, %p66
      %p69 = scmp.ne.s32.totalorder %s52, %s68
      %p70 = scmp.eq.s32.totalorder %s21, 0
      %p71 = por %p69, %p70
      %s72 = ssub.s32 %s23, %s37
      %s73 = ssub.s32 %s22, %s41
      %s74 = sor.u32 %s72, %s73
      %s75 = ssub.s32 %s24, %s33
      %s76 = sor.u32 %s74, %s75
      %p77 = scmp.eq.s32.totalorder %s76, 0
      %s79 = sadd.s32 %s78, 1
      %s80 = scalar_select %p77, %s78, %s79
      %p83 = pneg %p77
      %p84 = scmp.eq.s32.totalorder %s15, 1
      %p85 = por %p83, %p84
      %p86 = scmp.ne.s32.totalorder %s78, %s81
      %p87 = scmp.eq.s32.totalorder %s15, 0
      %p88 = por %p86, %p87
      %p89 = scmp.ne.s32.totalorder %s78, %s81
      %p90 = scmp.eq.s32.totalorder %s20, 1
      %p91 = por %p89, %p90
      %p92 = scmp.ne.s32.totalorder %s81, %s82
      %p93 = scmp.eq.s32.totalorder %s20, 0
      %p94 = por %p92, %p93
      %p95 = scmp.ne.s32.totalorder %s81, %s82
      %p96 = scmp.eq.s32.totalorder %s21, 1
      %p97 = por %p95, %p96
      %p99 = scmp.ne.s32.totalorder %s82, %s98
      %p100 = scmp.eq.s32.totalorder %s21, 0
      %p101 = por %p99, %p100
      %s102 = ssub.s32 %s22, %s41
      %p103 = scmp.eq.s32.totalorder %s102, 0
      %s105 = sadd.s32 %s104, 1
      %s106 = scalar_select %p103, %s104, %s105
      %p109 = pneg %p103
      %p110 = scmp.eq.s32.totalorder %s15, 1
      %p111 = por %p109, %p110
      %p112 = scmp.ne.s32.totalorder %s104, %s107
      %p113 = scmp.eq.s32.totalorder %s15, 0
      %p114 = por %p112, %p113
      %p115 = scmp.ne.s32.totalorder %s104, %s107
      %p116 = scmp.eq.s32.totalorder %s20, 1
      %p117 = por %p115, %p116
      %p118 = scmp.ne.s32.totalorder %s107, %s108
      %p119 = scmp.eq.s32.totalorder %s20, 0
      %p120 = por %p118, %p119
      %p121 = scmp.ne.s32.totalorder %s107, %s108
      %p122 = scmp.eq.s32.totalorder %s21, 1
      %p123 = por %p121, %p122
      %p125 = scmp.ne.s32.totalorder %s108, %s124
      %p126 = scmp.eq.s32.totalorder %s21, 0
      %p127 = por %p125, %p126
      %p128 = scmp.le.s32.totalorder 1, %s15
      %p129 = scmp.lt.s32.totalorder %s15, 3
      %p130 = pnand %p128, %p129
      %p131 = pneg %p130
      // Predicated region
      $region9: #{tpu_custom_call.1} parent=5 // pred_check
        _
      $region10: #{tpu_custom_call.1} parent=5 // pred_check_branch
        %133 = sbr.rel (%p130) target = $region12
      $region11: #{tpu_custom_call.1} parent=5 // pred_region
        %s134 = ssub.s32 %s15, 1
      $region12: #{tpu_custom_call.1} parent=5 // pred_fallthru
        _
      %p135 = scmp.lt.s32.totalorder %s15, 2
      // Predicated region
      $region13: #{tpu_custom_call.1} parent=5 // pred_check
        %p136 = pneg %p135
      $region14: #{tpu_custom_call.1} parent=5 // pred_check_branch
        %138 = sbr.rel (%p136) target = $region16
      $region15: #{tpu_custom_call.1} parent=5 // pred_region
        // Predicated region
        $region17: #{tpu_custom_call.1} parent=15 // pred_check
          %p139 = pneg %p58
        $region18: #{tpu_custom_call.1} parent=15 // pred_check_branch
          %141 = sbr.rel (%p139) target = $region20
        $region19: #{tpu_custom_call.1} parent=15 // pred_region
          %s142 = sand.u32 %s48, 1
          %s143 = scalar_lea.sflag [#allocation3], %s142
          %s144 = sand.u32 %s48, 1
          %s145 = smul.addr %s144, 8
          %s146 = scalar_lea.vmem [#allocation2], %s145
          %s147 = smul.u32 2, %s24
          %149 = vsyncadd %s143, 0
          %s150 = smul.addr %s22, 2
          %s151 = sadd.s32 %s147, %s150
          %s152 = smul.addr %s23, 2
          %s153 = sadd.s32 %s151, %s152
          %s154 = smul.addr %s153, 4
          %s155 = scalar_lea.hbm %s0, %s154
          %s157 = sshll.u32 %s155, 4
          %s158 = int_to_ptr.hbm [resolvable:$true] %s157
          %s159 = sshll.u32 %s146, 4
          %s160 = int_to_ptr.vmem [resolvable:$true] %s159
          %162 = dma.hbm_to_vmem [thread:$0]  %s158, 128, %s160, %s143
        $region20: #{tpu_custom_call.1} parent=15 // pred_fallthru
          _
        // Predicated region
        $region21: #{tpu_custom_call.1} parent=15 // pred_check
          %p163 = pneg %p88
        $region22: #{tpu_custom_call.1} parent=15 // pred_check_branch
          %165 = sbr.rel (%p163) target = $region24
        $region23: #{tpu_custom_call.1} parent=15 // pred_region
          %s166 = sand.u32 %s78, 1
          %s167 = scalar_lea.sflag [#allocation6], %s166
          %s168 = sand.u32 %s78, 1
          %s169 = smul.addr %s168, 8
          %s170 = scalar_lea.vmem [#allocation5], %s169
          %s171 = smul.u32 2, %s24
          %173 = vsyncadd %s167, 0
          %s174 = smul.addr %s22, 2
          %s175 = sadd.s32 %s171, %s174
          %s176 = smul.addr %s23, 2
          %s177 = sadd.s32 %s175, %s176
          %s178 = smul.addr %s177, 4
          %s179 = scalar_lea.hbm %s1, %s178
          %s181 = sshll.u32 %s179, 4
          %s182 = int_to_ptr.hbm [resolvable:$true] %s181
          %s183 = sshll.u32 %s170, 4
          %s184 = int_to_ptr.vmem [resolvable:$true] %s183
          %186 = dma.hbm_to_vmem [thread:$0]  %s182, 128, %s184, %s167
        $region24: #{tpu_custom_call.1} parent=15 // pred_fallthru
          _
      $region16: #{tpu_custom_call.1} parent=5 // pred_fallthru
        _
      %p187 = scmp.le.s32.totalorder 1, %s15
      %p188 = scmp.lt.s32.totalorder %s15, 3
      %p189 = pnand %p187, %p188
      %p190 = pneg %p189
      // Predicated region
      $region25: #{tpu_custom_call.1} parent=5 // pred_check
        _
      $region26: #{tpu_custom_call.1} parent=5 // pred_check_branch
        %192 = sbr.rel (%p189) target = $region28
      $region27: #{tpu_custom_call.1} parent=5 // pred_region
        %s193 = ssub.s32 %s15, 1
        %s194 = sand.u32 %s51, 1
        %s195 = scalar_lea.sflag [#allocation3], %s194
        %s196 = sand.u32 %s51, 1
        %s197 = smul.addr %s196, 8
        %s198 = scalar_lea.vmem [#allocation2], %s197
        // Predicated region
        $region29: #{tpu_custom_call.1} parent=27 // pred_check
          %p199 = pneg %p64
        $region30: #{tpu_custom_call.1} parent=27 // pred_check_branch
          %201 = sbr.rel (%p199) target = $region32
        $region31: #{tpu_custom_call.1} parent=27 // pred_region
          %203 = dma.done %s195, 128
        $region32: #{tpu_custom_call.1} parent=27 // pred_fallthru
          _
        %s204 = sand.u32 %s81, 1
        %s205 = scalar_lea.sflag [#allocation6], %s204
        %s206 = sand.u32 %s81, 1
        %s207 = smul.addr %s206, 8
        %s208 = scalar_lea.vmem [#allocation5], %s207
        // Predicated region
        $region33: #{tpu_custom_call.1} parent=27 // pred_check
          %p209 = pneg %p94
        $region34: #{tpu_custom_call.1} parent=27 // pred_check_branch
          %211 = sbr.rel (%p209) target = $region36
        $region35: #{tpu_custom_call.1} parent=27 // pred_region
          %213 = dma.done %s205, 128
        $region36: #{tpu_custom_call.1} parent=27 // pred_fallthru
          _
        %s214 = sand.u32 %s51, 1
        %s215 = scalar_lea.sflag [#allocation3], %s214
        %s216 = sand.u32 %s51, 1
        %s217 = smul.addr %s216, 8
        %s218 = scalar_lea.vmem [#allocation2], %s217
        %p219 = pneg %p64
        %p220 = pneg %p61
        %s221 = sand.u32 %s81, 1
        %s222 = scalar_lea.sflag [#allocation6], %s221
        %s223 = sand.u32 %s81, 1
        %s224 = smul.addr %s223, 8
        %s225 = scalar_lea.vmem [#allocation5], %s224
        %p226 = pneg %p94
        %p227 = pneg %p91
        %p228 = pneg %p120
        %p229 = pneg %p117
        %s230 = smul.u32 2, %s27
        %s231 = smul.u32 2, %s27
        %p232 = scmp.eq.s32.totalorder %s26, 0
        %p233 = scmp.eq.s32.totalorder %s27, 0
        %p234 = pnand %p232, %p233
        %p235 = pneg %p234
        // Predicated region
        $region37: #{tpu_custom_call.1} parent=27 // pred_check
          _
        $region38: #{tpu_custom_call.1} parent=27 // pred_check_branch
          %237 = sbr.rel (%p234) target = $region40
        $region39: #{tpu_custom_call.1} parent=27 // pred_region
          %vm238 = vcmask 27648
          %239 = vst.msk [vmem:[#allocation7] sm:$0xf] %vm238, 0.0
        $region40: #{tpu_custom_call.1} parent=27 // pred_fallthru
          _
        %v240 = vld [vmem:[%s198] sm:$0xff]
        %v241 = vld [vmem:[%s208] sm:$0xff]
        %243 = vst [vmem:[#allocation1] ss:$2 sm:$0xff] %v240
        %v244 = vld.sshfl [vmem:[#allocation1] sm:$0xff pattern:$0x75316420]
        %v245 = vld.sshfl [vmem:[#allocation1 + $0x8] sm:$0xff pattern:$0x75316420]
        %vm248 = vcmask 1043456
        %v249 = vsel %vm248, %v244, 0.0
        %v250 = vsel %vm248, %v245, 0.0
        %v251 = vadd.f32 %v249, %v250
        %252 = vadd.xlane.f32.xlu0 %v251
        %v253 = vpop.xlane.xlu0 %252
        %v254 = vmul.f32 %v240, %v240
        %256 = vst [vmem:[#allocation1] ss:$2 sm:$0xff] %v254
        %v257 = vld.sshfl [vmem:[#allocation1] sm:$0xff pattern:$0x75316420]
        %v258 = vld.sshfl [vmem:[#allocation1 + $0x8] sm:$0xff pattern:$0x75316420]
        %v261 = vsel %vm248, %v257, 0.0
        %v262 = vsel %vm248, %v258, 0.0
        %v263 = vadd.f32 %v261, %v262
        %264 = vadd.xlane.f32.xlu0 %v263
        %v265 = vpop.xlane.xlu0 %264
        %267 = vst [vmem:[#allocation1] ss:$2 sm:$0xff] %v241
        %v268 = vld.sshfl [vmem:[#allocation1] sm:$0xff pattern:$0x75316420]
        %v269 = vld.sshfl [vmem:[#allocation1 + $0x8] sm:$0xff pattern:$0x75316420]
        %v272 = vsel %vm248, %v268, 0.0
        %v273 = vsel %vm248, %v269, 0.0
        %v274 = vadd.f32 %v272, %v273
        %275 = vadd.xlane.f32.xlu0 %v274
        %v276 = vpop.xlane.xlu0 %275
        %v277 = vmul.f32 %v241, %v241
        %279 = vst [vmem:[#allocation1] ss:$2 sm:$0xff] %v277
        %v280 = vld.sshfl [vmem:[#allocation1] sm:$0xff pattern:$0x75316420]
        %v281 = vld.sshfl [vmem:[#allocation1 + $0x8] sm:$0xff pattern:$0x75316420]
        %v284 = vsel %vm248, %v280, 0.0
        %v285 = vsel %vm248, %v281, 0.0
        %v286 = vadd.f32 %v284, %v285
        %287 = vadd.xlane.f32.xlu0 %v286
        %v288 = vpop.xlane.xlu0 %287
        %v289 = vld [vmem:[#allocation7] sm:$0xf]
        %vm290 = vcmask 7168
        %v291 = vsel %vm290, %v253, %v265
        %vm292 = vcmask 15360
        %v293 = vsel %vm292, %v291, %v276
        %vm294 = vcmask 23552
        %v295 = vsel %vm294, %v293, %v288
        %v296 = vadd.f32 %v289, %v295
        %vm297 = vcmask 27648
        %298 = vst.msk [vmem:[#allocation7] sm:$0xf] %vm297, %v296
        // Predicated region
        $region41: #{tpu_custom_call.1} parent=27 // pred_check
          %p299 = pneg %p117
        $region42: #{tpu_custom_call.1} parent=27 // pred_check_branch
          %301 = sbr.rel (%p299) target = $region44
        $region43: #{tpu_custom_call.1} parent=27 // pred_region
          %303 = vsyncadd [#allocation4], 0
          %s304 = smul.addr %s25, 4
          %s305 = scalar_lea.hbm %s2, %s304
          %s307 = sshll.u32 [#allocation7], 4
          %s308 = int_to_ptr.vmem [resolvable:$true] %s307
          %s309 = sshll.u32 %s305, 4
          %s310 = int_to_ptr.hbm [resolvable:$true] %s309
          %312 = dma.vmem_to_hbm [thread:$0]  %s308, 64, %s310, [#allocation4]
        $region44: #{tpu_custom_call.1} parent=27 // pred_fallthru
          _
        // Predicated region
        $region45: #{tpu_custom_call.1} parent=27 // pred_check
          %p313 = pneg %p117
        $region46: #{tpu_custom_call.1} parent=27 // pred_check_branch
          %315 = sbr.rel (%p313) target = $region48
        $region47: #{tpu_custom_call.1} parent=27 // pred_region
          %317 = dma.done [#allocation4], 64
        $region48: #{tpu_custom_call.1} parent=27 // pred_fallthru
          _
      $region28: #{tpu_custom_call.1} parent=5 // pred_fallthru
        _
      %p318 = scmp.le.s32.totalorder 2, %s15
      // Predicated region
      $region49: #{tpu_custom_call.1} parent=5 // pred_check
        %p319 = pneg %p318
      $region50: #{tpu_custom_call.1} parent=5 // pred_check_branch
        %321 = sbr.rel (%p319) target = $region52
      $region51: #{tpu_custom_call.1} parent=5 // pred_region
        %s322 = ssub.s32 %s15, 2
      $region52: #{tpu_custom_call.1} parent=5 // pred_fallthru
        _
    $region6: #{tpu_custom_call.1} parent=1 // loop_footer
      %s19 = sadd.s32 1, %s15
    $region7: #{tpu_custom_call.1} parent=1 // loop_footer_branch
      %14 = sbr.rel target = $region3
    $region8: #{tpu_custom_call.1} parent=1 // loop_exit
      _
    %323 = vsyncpa [#allocation3], 1
    %s324 = scalar_lea.sflag [#allocation3], 1
    %325 = vsyncpa %s324, 1
    %326 = vsyncpa [#allocation6], 1
    %s327 = scalar_lea.sflag [#allocation6], 1
    %328 = vsyncpa %s327, 1
    %329 = vsyncpa [#allocation4], 1
    %s330 = scalar_lea.sflag [#allocation4], 1
    %331 = vsyncpa %s330, 1

</llo_original>
